<compile_context>
chip_gen: v7x
topology: tpu7x:2x2x1
jax: 0.10.0
libtpu: 0.0.40
codegen_flags: <defaults>
</compile_context>

<pallas_src>
import functools

import jax
import jax.numpy as jnp
from jax.experimental import pallas as pl
from jax.experimental.pallas import tpu as pltpu


# --------------------------------------------------------------------------
# small helpers
# --------------------------------------------------------------------------
def _round_up(n, m):
    return ((n + m - 1) // m) * m


def _cdiv(a, b):
    return -(-a // b)


def _sublane_pack(dtype):
    # native packed sublane tile: 8 rows for 4-byte, 16 for bf16, 32 for int8
    return max(8, 32 // jnp.dtype(dtype).itemsize)


@functools.lru_cache(maxsize=1)
def _vmem_capacity_bytes():
    """Physical per-core VMEM (128 MiB v5e/v6e, 64 MiB v7x)."""
    try:
        return int(pltpu.get_tpu_info().vmem_capacity_bytes)
    except Exception:
        return 64 * 1024 * 1024  # safe lower bound for all generations


def _pick_tile(dim_p, cands=(512, 256, 128)):
    """Largest candidate tile that divides a 128-aligned padded dim."""
    for c in cands:
        if dim_p % c == 0:
            return min(c, dim_p)
    return 128


# --------------------------------------------------------------------------
# fused kernel: whole MLP per batch tile, weights resident in VMEM scratch
# --------------------------------------------------------------------------
def _mlp_fused_kernel(x_ref, w1_hbm, b1_hbm, w2_hbm, b2_hbm, w3_hbm, b3_hbm,
                      o_ref,
                      w1_v, b1_v, w2_v, b2_v, w3_v, b3_v, sems):
    i = pl.program_id(0)

    # Weights are grid-invariant: DMA them HBM -> VMEM scratch exactly once
    # (single-buffered, half the VMEM of auto double-buffering).  Only W1/b1
    # are waited on before fc1; W2/W3 land while fc1 runs on the MXU.
    @pl.when(i == 0)
    def _start_weight_dmas():
        pltpu.make_async_copy(w1_hbm, w1_v, sems.at[0]).start()
        pltpu.make_async_copy(b1_hbm, b1_v, sems.at[1]).start()
        pltpu.make_async_copy(w2_hbm, w2_v, sems.at[2]).start()
        pltpu.make_async_copy(b2_hbm, b2_v, sems.at[3]).start()
        pltpu.make_async_copy(w3_hbm, w3_v, sems.at[4]).start()
        pltpu.make_async_copy(b3_hbm, b3_v, sems.at[5]).start()
        pltpu.make_async_copy(w1_hbm, w1_v, sems.at[0]).wait()
        pltpu.make_async_copy(b1_hbm, b1_v, sems.at[1]).wait()

    w_dtype = w1_v.dtype
    x = x_ref[...]

    # fc1: MXU in weight dtype with f32 accumulation; bias/ReLU in f32 on VPU.
    h = jnp.dot(x.astype(w_dtype), w1_v[...], preferred_element_type=jnp.float32)
    h = jnp.maximum(h + b1_v[...].astype(jnp.float32), 0.0)

    @pl.when(i == 0)
    def _wait_w2():
        pltpu.make_async_copy(w2_hbm, w2_v, sems.at[2]).wait()
        pltpu.make_async_copy(b2_hbm, b2_v, sems.at[3]).wait()

    h = jnp.dot(h.astype(w_dtype), w2_v[...], preferred_element_type=jnp.float32)
    h = jnp.maximum(h + b2_v[...].astype(jnp.float32), 0.0)

    @pl.when(i == 0)
    def _wait_w3():
        pltpu.make_async_copy(w3_hbm, w3_v, sems.at[4]).wait()
        pltpu.make_async_copy(b3_hbm, b3_v, sems.at[5]).wait()

    h = jnp.dot(h.astype(w_dtype), w3_v[...], preferred_element_type=jnp.float32)
    o_ref[...] = (h + b3_v[...].astype(jnp.float32)).astype(o_ref.dtype)


def _mlp_fused_call(xp, w1p, b1p, w2p, b2p, w3p, b3p, *, bb, vmem_limit):
    B_p, inp_p = xp.shape
    hid_p = w1p.shape[1]
    wdtype = w1p.dtype
    xbytes = jnp.dtype(xp.dtype).itemsize
    wbytes = jnp.dtype(wdtype).itemsize
    weight_elems = inp_p * hid_p + 2 * hid_p * hid_p + 3 * hid_p

    cost = pl.CostEstimate(
        flops=2 * B_p * (inp_p * hid_p + 2 * hid_p * hid_p),
        transcendentals=0,
        bytes_accessed=(B_p * inp_p * xbytes + weight_elems * wbytes
                        + B_p * hid_p * xbytes),
    )

    return pl.pallas_call(
        _mlp_fused_kernel,
        out_shape=jax.ShapeDtypeStruct((B_p, hid_p), xp.dtype),
        grid_spec=pltpu.PrefetchScalarGridSpec(
            num_scalar_prefetch=0,
            grid=(B_p // bb,),
            in_specs=[
                pl.BlockSpec((bb, inp_p), lambda i: (i, 0)),   # x tile (pipelined)
                pl.BlockSpec(memory_space=pl.ANY),             # W1 (HBM, manual DMA)
                pl.BlockSpec(memory_space=pl.ANY),             # b1
                pl.BlockSpec(memory_space=pl.ANY),             # W2
                pl.BlockSpec(memory_space=pl.ANY),             # b2
                pl.BlockSpec(memory_space=pl.ANY),             # W3
                pl.BlockSpec(memory_space=pl.ANY),             # b3
            ],
            out_specs=pl.BlockSpec((bb, hid_p), lambda i: (i, 0)),
            scratch_shapes=[
                pltpu.VMEM((inp_p, hid_p), wdtype),            # W1 resident
                pltpu.VMEM((1, hid_p), wdtype),                # b1
                pltpu.VMEM((hid_p, hid_p), wdtype),            # W2
                pltpu.VMEM((1, hid_p), wdtype),                # b2
                pltpu.VMEM((hid_p, hid_p), wdtype),            # W3
                pltpu.VMEM((1, hid_p), wdtype),                # b3
                pltpu.SemaphoreType.DMA((6,)),
            ],
        ),
        # "arbitrary": the one-time weight load is gated on program_id==0, so
        # the whole batch grid must run in-order on the core that owns the
        # weight scratch.  parallel vs arbitrary measures ~equal on v6e.
        # TODO(synk): v7x dual-TC batch sharding via core_map (each core needs
        # its own weight copy / its own first-iteration load).
        compiler_params=pltpu.CompilerParams(
            dimension_semantics=("arbitrary",),
            vmem_limit_bytes=vmem_limit),
        cost_estimate=cost,
    )(xp, w1p, b1p, w2p, b2p, w3p, b3p)


# --------------------------------------------------------------------------
# layered fallback: tiled linear(+bias+ReLU) with K-split accumulation.
# Used when the three weight matrices do not fit the VMEM budget.
# --------------------------------------------------------------------------
def _linear_relu_kernel(x_ref, w_ref, b_ref, o_ref, acc_ref, *, apply_relu):
    k = pl.program_id(2)

    @pl.when(k == 0)
    def _init():
        acc_ref[...] = jnp.zeros_like(acc_ref)

    acc_ref[...] += jnp.dot(x_ref[...].astype(w_ref.dtype), w_ref[...],
                            preferred_element_type=jnp.float32)

    @pl.when(k == pl.num_programs(2) - 1)
    def _finalize():
        r = acc_ref[...] + b_ref[...].astype(jnp.float32)
        if apply_relu:
            r = jnp.maximum(r, 0.0)
        o_ref[...] = r.astype(o_ref.dtype)


def _linear_pallas(x, w, b, *, apply_relu, tm, tn, tk, vmem_limit):
    M, K = x.shape
    N = w.shape[1]
    kernel = functools.partial(_linear_relu_kernel, apply_relu=apply_relu)
    return pl.pallas_call(
        kernel,
        out_shape=jax.ShapeDtypeStruct((M, N), x.dtype),
        grid_spec=pltpu.PrefetchScalarGridSpec(
            num_scalar_prefetch=0,
            grid=(M // tm, N // tn, K // tk),
            in_specs=[
                pl.BlockSpec((tm, tk), lambda i, j, k: (i, k)),
                pl.BlockSpec((tk, tn), lambda i, j, k: (k, j)),
                pl.BlockSpec((1, tn), lambda i, j, k: (0, j)),
            ],
            out_specs=pl.BlockSpec((tm, tn), lambda i, j, k: (i, j)),
            scratch_shapes=[pltpu.VMEM((tm, tn), jnp.float32)],
        ),
        compiler_params=pltpu.CompilerParams(
            dimension_semantics=("parallel", "parallel", "arbitrary"),
            vmem_limit_bytes=vmem_limit),
    )(x, w, b)


def _mlp_layered(x, w1p, b1p, w2p, b2p, w3p, b3p, *, hid_dim, pack):
    B, inp_dim = x.shape
    inp_p, hid_p = w1p.shape
    xbytes = jnp.dtype(x.dtype).itemsize
    wbytes = jnp.dtype(w1p.dtype).itemsize
    budget = int(_vmem_capacity_bytes() * 0.85)

    tm = max(pack, min(256, _round_up(B, pack)))
    n_tiles = _cdiv(B, tm)
    tm = _round_up(_cdiv(B, n_tiles), pack)          # rebalance -> minimal pad
    B_p = tm * n_tiles
    tn = _pick_tile(hid_p)
    tk1 = _pick_tile(inp_p)
    tk2 = _pick_tile(hid_p)

    def vlim(tk):
        need = (2 * tm * tk * xbytes + 2 * tk * tn * wbytes + 2 * tn * wbytes
                + 2 * tm * tn * xbytes + tm * tn * 4)
        return max(min(32 << 20, budget), min(int(need * 1.5), budget))

    xp = jnp.pad(x, ((0, B_p - B), (0, inp_p - inp_dim)))
    h = _linear_pallas(xp, w1p, b1p, apply_relu=True,
                       tm=tm, tn=tn, tk=tk1, vmem_limit=vlim(tk1))
    h = _linear_pallas(h, w2p, b2p, apply_relu=True,
                       tm=tm, tn=tn, tk=tk2, vmem_limit=vlim(tk2))
    out = _linear_pallas(h, w3p, b3p, apply_relu=False,
                         tm=tm, tn=tn, tk=tk2, vmem_limit=vlim(tk2))
    return out[:B, :hid_dim]


# --------------------------------------------------------------------------
# planning + jitted forward over pre-padded params
# --------------------------------------------------------------------------
def _plan_fused(B, inp_p, hid_p, xbytes, wbytes, block_b_max, pack):
    """Returns (bb, n_tiles, vmem_limit) or None if weights don't fit VMEM."""
    budget = int(_vmem_capacity_bytes() * 0.85)
    weight_bytes = (inp_p * hid_p + 2 * hid_p * hid_p + 3 * hid_p) * wbytes
    # per batch row: double-buffered x tile + double-buffered out tile
    # + ~3 live f32 intermediates
    per_row = 2 * inp_p * xbytes + 2 * hid_p * xbytes + 3 * hid_p * 4
    avail = budget - weight_bytes
    if avail < per_row * pack:
        return None  # resident weights + minimal tile exceed VMEM -> layered path

    bb = max(pack, min(avail // per_row, block_b_max, _round_up(B, pack)))
    bb = (bb // pack) * pack
    n_tiles = _cdiv(B, bb)
    bb = _round_up(_cdiv(B, n_tiles), pack)          # rebalance -> minimal pad
    need = weight_bytes + bb * per_row
    vmem_limit = max(min(32 << 20, budget), min(int(need * 1.25), budget))
    return bb, n_tiles, vmem_limit


@functools.partial(jax.jit,
                   static_argnames=("hid_dim", "block_b", "force_layered"))
def _mlp_forward_padded(x, w1p, b1p, w2p, b2p, w3p, b3p, *,
                        hid_dim, block_b, force_layered):
    B, inp_dim = x.shape
    inp_p, hid_p = w1p.shape
    xbytes = jnp.dtype(x.dtype).itemsize
    wbytes = jnp.dtype(w1p.dtype).itemsize
    pack = _sublane_pack(x.dtype)

    plan = None if force_layered else _plan_fused(
        B, inp_p, hid_p, xbytes, wbytes, block_b, pack)
    if plan is None:
        # hidden-dim tiled fallback (weights too large for resident VMEM,
        # or explicitly forced)
        return _mlp_layered(x, w1p, b1p, w2p, b2p, w3p, b3p,
                            hid_dim=hid_dim, pack=pack)

    bb, n_tiles, vmem_limit = plan
    B_p = bb * n_tiles
    # Only x is padded per call (weights were padded once at construction).
    # Zero padding is exact: padded x cols hit zero weight rows, padded hidden
    # units get zero weights + zero bias (ReLU(0)=0); padded batch rows and
    # padded output cols are sliced away below.
    xp = jnp.pad(x, ((0, B_p - B), (0, inp_p - inp_dim)))
    out = _mlp_fused_call(xp, w1p, b1p, w2p, b2p, w3p, b3p,
                          bb=bb, vmem_limit=vmem_limit)
    return out[:B, :hid_dim]


# --------------------------------------------------------------------------
# user-facing wrappers
# --------------------------------------------------------------------------
class PallasMLP:
    """fc1 -> ReLU -> fc2 -> ReLU -> fc3 fused Pallas TPU forward.

    Weights are passed pre-transposed as (in, out) and are lane-dense
    zero-padded to multiples of 128 *once* at construction (hoists per-call
    weight padding out of the hot path).  Pass bf16 weights on v5e/v6e/v7x
    for ~2x MXU throughput and half the weight VMEM/HBM; matmuls accumulate
    in f32 regardless.
    """
    # TODO(synk): optional fp8 weight path for v7x (needs pre-quantized
    # weights + scales; not numerically drop-in, so not enabled here).

    def __init__(self, w1, b1, w2, b2, w3, b3):
        self.inp_dim, self.hid_dim = int(w1.shape[0]), int(w1.shape[1])
        inp_p = _round_up(self.inp_dim, 128)
        hid_p = _round_up(self.hid_dim, 128)
        di, dh = inp_p - self.inp_dim, hid_p - self.hid_dim
        self.w1p = jnp.pad(w1, ((0, di), (0, dh)))
        self.w2p = jnp.pad(w2, ((0, dh), (0, dh)))
        self.w3p = jnp.pad(w3, ((0, dh), (0, dh)))
        self.b1p = jnp.pad(b1, (0, dh)).reshape(1, hid_p)
        self.b2p = jnp.pad(b2, (0, dh)).reshape(1, hid_p)
        self.b3p = jnp.pad(b3, (0, dh)).reshape(1, hid_p)

    def __call__(self, x, *, block_b=None, force_layered=False):
        assert x.ndim == 2 and x.shape[1] == self.inp_dim, x.shape
        if block_b is None:
            # upper bound only; the actual tile is sized from VMEM left after
            # the (single-buffered) resident weights.
            block_b = 256 if jnp.dtype(x.dtype).itemsize >= 4 else 512
        pack = _sublane_pack(x.dtype)
        block_b = max(pack, _round_up(int(block_b), pack))
        return _mlp_forward_padded(
            x, self.w1p, self.b1p, self.w2p, self.b2p, self.w3p, self.b3p,
            hid_dim=self.hid_dim, block_b=block_b,
            force_layered=bool(force_layered))


def mlp_forward(x, w1, b1, w2, b2, w3, b3, *, block_b=None,
                force_layered=False):
    """Convenience one-shot API. For repeated calls use PallasMLP (weights are
    padded once at construction instead of every call)."""
    return PallasMLP(w1, b1, w2, b2, w3, b3)(
        x, block_b=block_b, force_layered=force_layered)


def init_mlp_params(key, inp_dim, hid_dim, dtype=jnp.float32):
    """PyTorch nn.Linear-style init (uniform +-1/sqrt(fan_in)), weights stored
    pre-transposed to (in_dim, out_dim)."""
    keys = jax.random.split(key, 6)

    def linear(kw, kb, fan_in, fan_out):
        bound = 1.0 / jnp.sqrt(jnp.asarray(fan_in, dtype=jnp.float32))
        w = jax.random.uniform(kw, (fan_in, fan_out), dtype,
                               minval=-bound, maxval=bound)
        b = jax.random.uniform(kb, (fan_out,), dtype,
                               minval=-bound, maxval=bound)
        return w, b

    w1, b1 = linear(keys[0], keys[1], inp_dim, hid_dim)
    w2, b2 = linear(keys[2], keys[3], hid_dim, hid_dim)
    w3, b3 = linear(keys[4], keys[5], hid_dim, hid_dim)
    return w1, b1, w2, b2, w3, b3


def mlp_reference(x, w1, b1, w2, b2, w3, b3):
    h = jax.nn.relu(x @ w1 + b1)
    h = jax.nn.relu(h @ w2 + b2)
    return h @ w3 + b3


if __name__ == "__main__":
    key = jax.random.PRNGKey(0)
    k_x, k_p, k_x2, k_p2 = jax.random.split(key, 4)

    # ---- small shapes matching the module spec (f32, tight tolerance) ----
    B, INP_DIM, HID_DIM = 8, 16, 32
    x = jax.random.normal(k_x, (B, INP_DIM), jnp.float32)
    w1, b1, w2, b2, w3, b3 = init_mlp_params(k_p, INP_DIM, HID_DIM, jnp.float32)
    mlp = PallasMLP(w1, b1, w2, b2, w3, b3)

    out = jax.block_until_ready(mlp(x))
    ref = mlp_reference(x, w1, b1, w2, b2, w3, b3)
    assert out.shape == (B, HID_DIM), out.shape
    assert jnp.allclose(out, ref, atol=1e-5, rtol=1e-5), \
        float(jnp.max(jnp.abs(out - ref)))

    # ---- bf16 weights (recommended MXU path on v5e/v6e/v7x), f32 accumulate --
    mlp_bf16 = PallasMLP(*(p.astype(jnp.bfloat16)
                           for p in (w1, b1, w2, b2, w3, b3)))
    out_bf16 = jax.block_until_ready(mlp_bf16(x))
    ref_bf16 = mlp_reference(
        x, *(p.astype(jnp.bfloat16).astype(jnp.float32)
             for p in (w1, b1, w2, b2, w3, b3)))
    assert out_bf16.shape == (B, HID_DIM)
    assert jnp.allclose(out_bf16.astype(jnp.float32), ref_bf16,
                        atol=1e-1, rtol=1e-1)

    # ---- hidden-dim tiled fallback path (forced at small shapes) ----
    out_layered = jax.block_until_ready(mlp(x, force_layered=True))
    assert jnp.allclose(out_layered, ref, atol=1e-5, rtol=1e-5), \
        float(jnp.max(jnp.abs(out_layered - ref)))

    # ---- non-aligned, multi-tile shapes: exercises padding + grid > 1 ----
    B2, INP2, HID2 = 300, 200, 256
    x2 = jax.random.normal(k_x2, (B2, INP2), jnp.float32)
    params2 = init_mlp_params(k_p2, INP2, HID2, jnp.float32)
    mlp2 = PallasMLP(*params2)
    out2 = jax.block_until_ready(mlp2(x2, block_b=128))
    ref2 = mlp_reference(x2, *params2)
    assert out2.shape == (B2, HID2), out2.shape
    assert jnp.allclose(out2, ref2, atol=5e-2, rtol=5e-2), \
        float(jnp.max(jnp.abs(out2 - ref2)))

    print("KERNEL_OK")
</pallas_src>

<mosaic_0001>
module attributes {stable_mosaic.version = 11 : i64} {
  func.func @_mlp_fused_kernel(%arg0: i32, %arg1: memref<8x128xf32, #tpu.memory_space<vmem>>, %arg2: memref<128x128xf32, #tpu.memory_space<any>>, %arg3: memref<1x128xf32, #tpu.memory_space<any>>, %arg4: memref<128x128xf32, #tpu.memory_space<any>>, %arg5: memref<1x128xf32, #tpu.memory_space<any>>, %arg6: memref<128x128xf32, #tpu.memory_space<any>>, %arg7: memref<1x128xf32, #tpu.memory_space<any>>, %arg8: memref<8x128xf32, #tpu.memory_space<vmem>>, %arg9: memref<128x128xf32, #tpu.memory_space<vmem>>, %arg10: memref<1x128xf32, #tpu.memory_space<vmem>>, %arg11: memref<128x128xf32, #tpu.memory_space<vmem>>, %arg12: memref<1x128xf32, #tpu.memory_space<vmem>>, %arg13: memref<128x128xf32, #tpu.memory_space<vmem>>, %arg14: memref<1x128xf32, #tpu.memory_space<vmem>>, %arg15: memref<6x!tpu.dma_semaphore, #tpu.memory_space<semaphore_mem>>) attributes {dimension_semantics = [#tpu.dimension_semantics<arbitrary>], iteration_bounds = array<i64: 1>, scalar_prefetch = 0 : i64, scratch_operands = 7 : i64, tpu.core_type = #tpu.core_type<tc>, window_params = [{transform_indices = @transform_0, window_bounds = array<i64: 8, 128>}, {}, {}, {}, {}, {}, {}, {transform_indices = @transform_7, window_bounds = array<i64: 8, 128>}]} {
    %c0_i32 = arith.constant 0 : i32
    %0 = arith.cmpi eq, %arg0, %c0_i32 : i32
    %1 = arith.extui %0 : i1 to i32
    %c0_i32_0 = arith.constant 0 : i32
    %2 = arith.cmpi ne, %1, %c0_i32_0 : i32
    scf.if %2 {
      %c0_i32_24 = arith.constant 0 : i32
      %30 = tpu.memref_slice %arg15[%c0_i32_24] : memref<6x!tpu.dma_semaphore, #tpu.memory_space<semaphore_mem>> -> memref<1x!tpu.dma_semaphore, #tpu.memory_space<semaphore_mem>>
      %31 = tpu.memref_squeeze %30 : memref<1x!tpu.dma_semaphore, #tpu.memory_space<semaphore_mem>> -> memref<!tpu.dma_semaphore, #tpu.memory_space<semaphore_mem>>
      tpu.enqueue_dma source(%arg2 : memref<128x128xf32, #tpu.memory_space<any>>) target(%arg9 : memref<128x128xf32, #tpu.memory_space<vmem>>) target_semaphore(%31 : memref<!tpu.dma_semaphore, #tpu.memory_space<semaphore_mem>>)
      %c1_i32 = arith.constant 1 : i32
      %32 = tpu.memref_slice %arg15[%c1_i32] : memref<6x!tpu.dma_semaphore, #tpu.memory_space<semaphore_mem>> -> memref<1x!tpu.dma_semaphore, #tpu.memory_space<semaphore_mem>>
      %33 = tpu.memref_squeeze %32 : memref<1x!tpu.dma_semaphore, #tpu.memory_space<semaphore_mem>> -> memref<!tpu.dma_semaphore, #tpu.memory_space<semaphore_mem>>
      tpu.enqueue_dma source(%arg3 : memref<1x128xf32, #tpu.memory_space<any>>) target(%arg10 : memref<1x128xf32, #tpu.memory_space<vmem>>) target_semaphore(%33 : memref<!tpu.dma_semaphore, #tpu.memory_space<semaphore_mem>>)
      %c2_i32 = arith.constant 2 : i32
      %34 = tpu.memref_slice %arg15[%c2_i32] : memref<6x!tpu.dma_semaphore, #tpu.memory_space<semaphore_mem>> -> memref<1x!tpu.dma_semaphore, #tpu.memory_space<semaphore_mem>>
      %35 = tpu.memref_squeeze %34 : memref<1x!tpu.dma_semaphore, #tpu.memory_space<semaphore_mem>> -> memref<!tpu.dma_semaphore, #tpu.memory_space<semaphore_mem>>
      tpu.enqueue_dma source(%arg4 : memref<128x128xf32, #tpu.memory_space<any>>) target(%arg11 : memref<128x128xf32, #tpu.memory_space<vmem>>) target_semaphore(%35 : memref<!tpu.dma_semaphore, #tpu.memory_space<semaphore_mem>>)
      %c3_i32 = arith.constant 3 : i32
      %36 = tpu.memref_slice %arg15[%c3_i32] : memref<6x!tpu.dma_semaphore, #tpu.memory_space<semaphore_mem>> -> memref<1x!tpu.dma_semaphore, #tpu.memory_space<semaphore_mem>>
      %37 = tpu.memref_squeeze %36 : memref<1x!tpu.dma_semaphore, #tpu.memory_space<semaphore_mem>> -> memref<!tpu.dma_semaphore, #tpu.memory_space<semaphore_mem>>
      tpu.enqueue_dma source(%arg5 : memref<1x128xf32, #tpu.memory_space<any>>) target(%arg12 : memref<1x128xf32, #tpu.memory_space<vmem>>) target_semaphore(%37 : memref<!tpu.dma_semaphore, #tpu.memory_space<semaphore_mem>>)
      %c4_i32 = arith.constant 4 : i32
      %38 = tpu.memref_slice %arg15[%c4_i32] : memref<6x!tpu.dma_semaphore, #tpu.memory_space<semaphore_mem>> -> memref<1x!tpu.dma_semaphore, #tpu.memory_space<semaphore_mem>>
      %39 = tpu.memref_squeeze %38 : memref<1x!tpu.dma_semaphore, #tpu.memory_space<semaphore_mem>> -> memref<!tpu.dma_semaphore, #tpu.memory_space<semaphore_mem>>
      tpu.enqueue_dma source(%arg6 : memref<128x128xf32, #tpu.memory_space<any>>) target(%arg13 : memref<128x128xf32, #tpu.memory_space<vmem>>) target_semaphore(%39 : memref<!tpu.dma_semaphore, #tpu.memory_space<semaphore_mem>>)
      %c5_i32 = arith.constant 5 : i32
      %40 = tpu.memref_slice %arg15[%c5_i32] : memref<6x!tpu.dma_semaphore, #tpu.memory_space<semaphore_mem>> -> memref<1x!tpu.dma_semaphore, #tpu.memory_space<semaphore_mem>>
      %41 = tpu.memref_squeeze %40 : memref<1x!tpu.dma_semaphore, #tpu.memory_space<semaphore_mem>> -> memref<!tpu.dma_semaphore, #tpu.memory_space<semaphore_mem>>
      tpu.enqueue_dma source(%arg7 : memref<1x128xf32, #tpu.memory_space<any>>) target(%arg14 : memref<1x128xf32, #tpu.memory_space<vmem>>) target_semaphore(%41 : memref<!tpu.dma_semaphore, #tpu.memory_space<semaphore_mem>>)
      %c0_i32_25 = arith.constant 0 : i32
      %42 = tpu.memref_slice %arg15[%c0_i32_25] : memref<6x!tpu.dma_semaphore, #tpu.memory_space<semaphore_mem>> -> memref<1x!tpu.dma_semaphore, #tpu.memory_space<semaphore_mem>>
      %43 = tpu.memref_squeeze %42 : memref<1x!tpu.dma_semaphore, #tpu.memory_space<semaphore_mem>> -> memref<!tpu.dma_semaphore, #tpu.memory_space<semaphore_mem>>
      tpu.wait_dma2 semaphore(%43 : memref<!tpu.dma_semaphore, #tpu.memory_space<semaphore_mem>>) src(%arg2 : memref<128x128xf32, #tpu.memory_space<any>>) dst(%arg9 : memref<128x128xf32, #tpu.memory_space<vmem>>)
      %c1_i32_26 = arith.constant 1 : i32
      %44 = tpu.memref_slice %arg15[%c1_i32_26] : memref<6x!tpu.dma_semaphore, #tpu.memory_space<semaphore_mem>> -> memref<1x!tpu.dma_semaphore, #tpu.memory_space<semaphore_mem>>
      %45 = tpu.memref_squeeze %44 : memref<1x!tpu.dma_semaphore, #tpu.memory_space<semaphore_mem>> -> memref<!tpu.dma_semaphore, #tpu.memory_space<semaphore_mem>>
      tpu.wait_dma2 semaphore(%45 : memref<!tpu.dma_semaphore, #tpu.memory_space<semaphore_mem>>) src(%arg3 : memref<1x128xf32, #tpu.memory_space<any>>) dst(%arg10 : memref<1x128xf32, #tpu.memory_space<vmem>>)
    } else {
    }
    %c0 = arith.constant 0 : index
    %c0_1 = arith.constant 0 : index
    %3 = vector.load %arg1[%c0, %c0_1] : memref<8x128xf32, #tpu.memory_space<vmem>>, vector<8x128xf32>
    %c0_2 = arith.constant 0 : index
    %c0_3 = arith.constant 0 : index
    %4 = vector.load %arg9[%c0_2, %c0_3] : memref<128x128xf32, #tpu.memory_space<vmem>>, vector<128x128xf32>
    %cst = arith.constant dense<0.000000e+00> : vector<8x128xf32>
    %5 = tpu.matmul %3, %4, %cst {dimension_numbers = #tpu.dot_dimension_numbers<[1], [0], [0], [1], [0, 0, 1, 1], [], []>} : vector<8x128xf32>, vector<128x128xf32>, vector<8x128xf32> -> vector<8x128xf32>
    %c0_4 = arith.constant 0 : index
    %c0_5 = arith.constant 0 : index
    %6 = vector.load %arg10[%c0_4, %c0_5] : memref<1x128xf32, #tpu.memory_space<vmem>>, vector<1x128xf32>
    %7 = vector.broadcast %6 : vector<1x128xf32> to vector<8x128xf32>
    %8 = arith.addf %5, %7 : vector<8x128xf32>
    %cst_6 = arith.constant 0.000000e+00 : f32
    %9 = vector.broadcast %cst_6 : f32 to vector<8x128xf32>
    %10 = arith.maximumf %8, %9 : vector<8x128xf32>
    %c0_i32_7 = arith.constant 0 : i32
    %11 = arith.cmpi eq, %arg0, %c0_i32_7 : i32
    %12 = arith.extui %11 : i1 to i32
    %c0_i32_8 = arith.constant 0 : i32
    %13 = arith.cmpi ne, %12, %c0_i32_8 : i32
    scf.if %13 {
      %c2_i32 = arith.constant 2 : i32
      %30 = tpu.memref_slice %arg15[%c2_i32] : memref<6x!tpu.dma_semaphore, #tpu.memory_space<semaphore_mem>> -> memref<1x!tpu.dma_semaphore, #tpu.memory_space<semaphore_mem>>
      %31 = tpu.memref_squeeze %30 : memref<1x!tpu.dma_semaphore, #tpu.memory_space<semaphore_mem>> -> memref<!tpu.dma_semaphore, #tpu.memory_space<semaphore_mem>>
      tpu.wait_dma2 semaphore(%31 : memref<!tpu.dma_semaphore, #tpu.memory_space<semaphore_mem>>) src(%arg4 : memref<128x128xf32, #tpu.memory_space<any>>) dst(%arg11 : memref<128x128xf32, #tpu.memory_space<vmem>>)
      %c3_i32 = arith.constant 3 : i32
      %32 = tpu.memref_slice %arg15[%c3_i32] : memref<6x!tpu.dma_semaphore, #tpu.memory_space<semaphore_mem>> -> memref<1x!tpu.dma_semaphore, #tpu.memory_space<semaphore_mem>>
      %33 = tpu.memref_squeeze %32 : memref<1x!tpu.dma_semaphore, #tpu.memory_space<semaphore_mem>> -> memref<!tpu.dma_semaphore, #tpu.memory_space<semaphore_mem>>
      tpu.wait_dma2 semaphore(%33 : memref<!tpu.dma_semaphore, #tpu.memory_space<semaphore_mem>>) src(%arg5 : memref<1x128xf32, #tpu.memory_space<any>>) dst(%arg12 : memref<1x128xf32, #tpu.memory_space<vmem>>)
    } else {
    }
    %c0_9 = arith.constant 0 : index
    %c0_10 = arith.constant 0 : index
    %14 = vector.load %arg11[%c0_9, %c0_10] : memref<128x128xf32, #tpu.memory_space<vmem>>, vector<128x128xf32>
    %cst_11 = arith.constant dense<0.000000e+00> : vector<8x128xf32>
    %15 = tpu.matmul %10, %14, %cst_11 {dimension_numbers = #tpu.dot_dimension_numbers<[1], [0], [0], [1], [0, 0, 1, 1], [], []>} : vector<8x128xf32>, vector<128x128xf32>, vector<8x128xf32> -> vector<8x128xf32>
    %c0_12 = arith.constant 0 : index
    %c0_13 = arith.constant 0 : index
    %16 = vector.load %arg12[%c0_12, %c0_13] : memref<1x128xf32, #tpu.memory_space<vmem>>, vector<1x128xf32>
    %17 = vector.broadcast %16 : vector<1x128xf32> to vector<8x128xf32>
    %18 = arith.addf %15, %17 : vector<8x128xf32>
    %cst_14 = arith.constant 0.000000e+00 : f32
    %19 = vector.broadcast %cst_14 : f32 to vector<8x128xf32>
    %20 = arith.maximumf %18, %19 : vector<8x128xf32>
    %c0_i32_15 = arith.constant 0 : i32
    %21 = arith.cmpi eq, %arg0, %c0_i32_15 : i32
    %22 = arith.extui %21 : i1 to i32
    %c0_i32_16 = arith.constant 0 : i32
    %23 = arith.cmpi ne, %22, %c0_i32_16 : i32
    scf.if %23 {
      %c4_i32 = arith.constant 4 : i32
      %30 = tpu.memref_slice %arg15[%c4_i32] : memref<6x!tpu.dma_semaphore, #tpu.memory_space<semaphore_mem>> -> memref<1x!tpu.dma_semaphore, #tpu.memory_space<semaphore_mem>>
      %31 = tpu.memref_squeeze %30 : memref<1x!tpu.dma_semaphore, #tpu.memory_space<semaphore_mem>> -> memref<!tpu.dma_semaphore, #tpu.memory_space<semaphore_mem>>
      tpu.wait_dma2 semaphore(%31 : memref<!tpu.dma_semaphore, #tpu.memory_space<semaphore_mem>>) src(%arg6 : memref<128x128xf32, #tpu.memory_space<any>>) dst(%arg13 : memref<128x128xf32, #tpu.memory_space<vmem>>)
      %c5_i32 = arith.constant 5 : i32
      %32 = tpu.memref_slice %arg15[%c5_i32] : memref<6x!tpu.dma_semaphore, #tpu.memory_space<semaphore_mem>> -> memref<1x!tpu.dma_semaphore, #tpu.memory_space<semaphore_mem>>
      %33 = tpu.memref_squeeze %32 : memref<1x!tpu.dma_semaphore, #tpu.memory_space<semaphore_mem>> -> memref<!tpu.dma_semaphore, #tpu.memory_space<semaphore_mem>>
      tpu.wait_dma2 semaphore(%33 : memref<!tpu.dma_semaphore, #tpu.memory_space<semaphore_mem>>) src(%arg7 : memref<1x128xf32, #tpu.memory_space<any>>) dst(%arg14 : memref<1x128xf32, #tpu.memory_space<vmem>>)
    } else {
    }
    %c0_17 = arith.constant 0 : index
    %c0_18 = arith.constant 0 : index
    %24 = vector.load %arg13[%c0_17, %c0_18] : memref<128x128xf32, #tpu.memory_space<vmem>>, vector<128x128xf32>
    %cst_19 = arith.constant dense<0.000000e+00> : vector<8x128xf32>
    %25 = tpu.matmul %20, %24, %cst_19 {dimension_numbers = #tpu.dot_dimension_numbers<[1], [0], [0], [1], [0, 0, 1, 1], [], []>} : vector<8x128xf32>, vector<128x128xf32>, vector<8x128xf32> -> vector<8x128xf32>
    %c0_20 = arith.constant 0 : index
    %c0_21 = arith.constant 0 : index
    %26 = vector.load %arg14[%c0_20, %c0_21] : memref<1x128xf32, #tpu.memory_space<vmem>>, vector<1x128xf32>
    %27 = vector.broadcast %26 : vector<1x128xf32> to vector<8x128xf32>
    %28 = arith.addf %25, %27 : vector<8x128xf32>
    %c0_22 = arith.constant 0 : index
    %c0_23 = arith.constant 0 : index
    %29 = vector.load %arg8[%c0_22, %c0_23] : memref<8x128xf32, #tpu.memory_space<vmem>>, vector<8x128xf32>
    tpu.vector_store %arg8[%c0_22, %c0_23], %28 {strides = array<i32>} : memref<8x128xf32, #tpu.memory_space<vmem>>, vector<8x128xf32>,
    return
  }
  func.func @transform_0(%arg0: i32) -> (i32, i32) {
    %c0_i32 = arith.constant 0 : i32
    %c0_i32_0 = arith.constant 0 : i32
    return %arg0, %c0_i32 : i32, i32
  }
  func.func @transform_7(%arg0: i32) -> (i32, i32) {
    %c0_i32 = arith.constant 0 : i32
    %c0_i32_0 = arith.constant 0 : i32
    return %arg0, %c0_i32 : i32, i32
  }
}

</mosaic_0001>

<llo_original>
// kernel: _mlp_forward_padded.1
$region0: #{_mlp_forward_padded.1}
  #allocation0 [shape = 'u32[]', space=smem, size = 0x4, offset = 0x4, fixed_abs, tag = 'smem constant byte address 0x4 - core index']
  #allocation1 [shape = 'u32[144,128]{1,0:T(1,128)}', space=vmem, size = 0x12000, scoped, tag = 'internal scratch']
  #allocation2 [shape = 'f32[128,128]{1,0:T(8,128)}', space=vmem, size = 0x10000, scoped, tag = 'scratch operand']
  #allocation3 [shape = 'f32[1,128]{1,0:T(1,128)}', space=vmem, size = 0x200, scoped, tag = 'scratch operand']
  #allocation4 [shape = 'f32[128,128]{1,0:T(8,128)}', space=vmem, size = 0x10000, scoped, tag = 'scratch operand']
  #allocation5 [shape = 'f32[1,128]{1,0:T(1,128)}', space=vmem, size = 0x200, scoped, tag = 'scratch operand']
  #allocation6 [shape = 'f32[128,128]{1,0:T(8,128)}', space=vmem, size = 0x10000, scoped, tag = 'scratch operand']
  #allocation7 [shape = 'f32[1,128]{1,0:T(1,128)}', space=vmem, size = 0x200, scoped, tag = 'scratch operand']
  #allocation8 [shape = 's32[6]{0}', space=sflag, size = 0x18, scoped, tag = 'scratch operand']
  #allocation11 [shape = 's32[]', space=sflag, size = 0x4, offset = 0, fixed_abs, tag = 'sflag constant byte address 0x0 - dummy sync flag']
  #allocation12 [shape = 's32[]', space=sflag, size = 0x4, offset = 0, fixed_abs, tag = 'sflag constant byte address 0x0 - dummy sync flag']
  #allocation13 [shape = 'u32[]', space=smem, size = 0x4, offset = 0x44, fixed_abs, tag = 'smem constant byte address 0x44 - assertion arg 0']
  #allocation14 [shape = 'u32[]', space=smem, size = 0x4, offset = 0x48, fixed_abs, tag = 'smem constant byte address 0x48 - assertion arg 1']
  #allocation15 [shape = 's32[]', space=sflag, size = 0x4, offset = 0, fixed_abs, tag = 'sflag constant byte address 0x0 - dummy sync flag']
  #allocation16 [shape = 's32[]', space=sflag, size = 0x4, offset = 0, fixed_abs, tag = 'sflag constant byte address 0x0 - dummy sync flag']
  #allocation17 [shape = 's32[]', space=sflag, size = 0x4, offset = 0, fixed_abs, tag = 'sflag constant byte address 0x0 - dummy sync flag']
  #allocation18 [shape = 's32[]', space=sflag, size = 0x4, offset = 0, fixed_abs, tag = 'sflag constant byte address 0x0 - dummy sync flag']
  #allocation19 [shape = 's32[]', space=sflag, size = 0x4, offset = 0, fixed_abs, tag = 'sflag constant byte address 0x0 - dummy sync flag']
  #allocation20 [shape = 's32[]', space=sflag, size = 0x4, offset = 0, fixed_abs, tag = 'sflag constant byte address 0x0 - dummy sync flag']
  #allocation21 [shape = 's32[]', space=sflag, size = 0x4, offset = 0, fixed_abs, tag = 'sflag constant byte address 0x0 - dummy sync flag']
  %s0 = inlined_call_operand.vmem [shape: f32[8,128], index: 0, kind: input, shape index: {}]
  %s1 = inlined_call_operand.hbm [shape: f32[128,128], index: 1, kind: input, shape index: {}]
  %s2 = inlined_call_operand.vmem [shape: f32[1,128], index: 2, kind: input, shape index: {}]
  %s3 = inlined_call_operand.hbm [shape: f32[128,128], index: 3, kind: input, shape index: {}]
  %s4 = inlined_call_operand.vmem [shape: f32[1,128], index: 4, kind: input, shape index: {}]
  %s5 = inlined_call_operand.hbm [shape: f32[128,128], index: 5, kind: input, shape index: {}]
  %s6 = inlined_call_operand.vmem [shape: f32[1,128], index: 6, kind: input, shape index: {}]
  %s7 = inlined_call_operand.hbm [shape: f32[8,128], index: 7, kind: output, shape index: {}]
  %s8 = sld [smem:[#allocation0]]
  $region128: #{_mlp_forward_padded.1} parent=0
    _
  %s10 = ssub.s32 1, %s8
  %s11 = scalar_select 0, %s10, %s8
  $region1: #{_mlp_forward_padded.1} parent=0
    #allocation9 [shape = 'u8[4096]{0}', space=vmem, size = 0x1000, scoped, tag = 'output window, operand 0, single buffered']
    #allocation10 [shape = 's32[1]{0}', space=sflag, size = 0x4, scoped, tag = 'scoped memory for _mlp_forward_padded.1']
    %12 = vsyncpa [#allocation10], 0
    // Predicated region
    $region2: #{_mlp_forward_padded.1} parent=1 // pred_check
      _
    $region3: #{_mlp_forward_padded.1} parent=1 // pred_check_branch
      %14 = sbr.rel (0) target = $region5
    $region4: #{_mlp_forward_padded.1} parent=1 // pred_region
      _
    $region5: #{_mlp_forward_padded.1} parent=1 // pred_fallthru
      _
    %p15 = scmp.eq.s32.totalorder 0, 0
    // Predicated region
    $region6: #{_mlp_forward_padded.1} parent=1 // pred_check
      %p16 = pneg %p15
    $region7: #{_mlp_forward_padded.1} parent=1 // pred_check_branch
      %18 = sbr.rel (%p16) target = $region9
    $region8: #{_mlp_forward_padded.1} parent=1 // pred_region
      // Predicated region
      $region10: #{_mlp_forward_padded.1} parent=8 // pred_check
        _
      $region11: #{_mlp_forward_padded.1} parent=8 // pred_check_branch
        %20 = sbr.rel target = $region13
      $region12: #{_mlp_forward_padded.1} parent=8 // pred_region
        %21 = sst [smem:[#allocation13]] [#allocation12]
        %22 = sst [smem:[#allocation14]] [#allocation11]
      $region13: #{_mlp_forward_padded.1} parent=8 // pred_fallthru
        _
      %24 = shalt.err (0)
      %s26 = sshll.u32 [#allocation2], 4
      %s27 = int_to_ptr.vmem [resolvable:$true] %s26
      %29 = dma.hbm_to_vmem [thread:$0]  %s1, 2048, %s27, [#allocation8]
      %s30 = scalar_lea.sflag [#allocation8], 1
      %p32 = scmp.lt.u32.totalorder 1, 8
      %p33 = pneg %p32
      // Predicated region
      $region14: #{_mlp_forward_padded.1} parent=8 // pred_check
        _
      $region15: #{_mlp_forward_padded.1} parent=8 // pred_check_branch
        %35 = sbr.rel (%p32) target = $region17
      $region16: #{_mlp_forward_padded.1} parent=8 // pred_region
        %s50 = sand.u32 1, 7
        %p51 = scmp.eq.s32.totalorder %s50, 0
        %p52 = pneg %p51
        // Predicated region
        $region29: #{_mlp_forward_padded.1} parent=16 // pred_check
          _
        $region30: #{_mlp_forward_padded.1} parent=16 // pred_check_branch
          %54 = sbr.rel (%p51) target = $region32
        $region31: #{_mlp_forward_padded.1} parent=16 // pred_region
          %s55 = sand.u32 1, 7
          %s56 = ssub.s32 1, %s55
          %s57 = scalar_lea.vmem %s2, %s56
          %s58 = ssub.s32 1, %s55
          %s59 = scalar_lea.vmem [#allocation3], %s58
          %s60 = sshllo.u32 0, %s55
          loop: start=0, step=1, limit=1
          $region33: #{_mlp_forward_padded.1} parent=31 // loop_pre_header
            _
          $region34: #{_mlp_forward_padded.1} parent=31 // loop_header
            %s62 = sphi 0, %s66
            %p63 = scmp.ge.s32.totalorder %s62, 1
            %s67 = sphi %s57, %s57
            %s68 = sphi %s59, %s59
          $region35: #{_mlp_forward_padded.1} parent=31 // loop_header_branch
            %65 = sbr.rel (%p63) target = $region39
          $region36: #{_mlp_forward_padded.1} parent=31 // loop_body
            %v69 = vld [vmem:[%s67] sm:%s60]
            %70 = vst [vmem:[%s68] sm:%s60] %v69
          $region37: #{_mlp_forward_padded.1} parent=31 // loop_footer
            %s66 = sadd.s32 1, %s62
          $region38: #{_mlp_forward_padded.1} parent=31 // loop_footer_branch
            %61 = sbr.rel target = $region34
          $region39: #{_mlp_forward_padded.1} parent=31 // loop_exit
            _
        $region32: #{_mlp_forward_padded.1} parent=16 // pred_fallthru
          _
      $region17: #{_mlp_forward_padded.1} parent=8 // pred_fallthru
        _
      // Predicated region
      $region18: #{_mlp_forward_padded.1} parent=8 // pred_check
        %p36 = pneg %p32
      $region19: #{_mlp_forward_padded.1} parent=8 // pred_check_branch
        %38 = sbr.rel (%p36) target = $region21
      $region20: #{_mlp_forward_padded.1} parent=8 // pred_region
        %s39 = sshllo.u32 0, 1
        loop: start=0, step=1, limit=1
        $region22: #{_mlp_forward_padded.1} parent=20 // loop_pre_header
          _
        $region23: #{_mlp_forward_padded.1} parent=20 // loop_header
          %s41 = sphi 0, %s45
          %p42 = scmp.ge.s32.totalorder %s41, 1
          %s46 = sphi %s2, %s2
          %s47 = sphi [#allocation3], [#allocation3]
        $region24: #{_mlp_forward_padded.1} parent=20 // loop_header_branch
          %44 = sbr.rel (%p42) target = $region28
        $region25: #{_mlp_forward_padded.1} parent=20 // loop_body
          %v48 = vld [vmem:[%s46] sm:%s39]
          %49 = vst [vmem:[%s47] sm:%s39] %v48
        $region26: #{_mlp_forward_padded.1} parent=20 // loop_footer
          %s45 = sadd.s32 1, %s41
        $region27: #{_mlp_forward_padded.1} parent=20 // loop_footer_branch
          %40 = sbr.rel target = $region23
        $region28: #{_mlp_forward_padded.1} parent=20 // loop_exit
          _
      $region21: #{_mlp_forward_padded.1} parent=8 // pred_fallthru
        _
      // Predicated region
      $region40: #{_mlp_forward_padded.1} parent=8 // pred_check
        _
      $region41: #{_mlp_forward_padded.1} parent=8 // pred_check_branch
        %73 = sbr.rel (0) target = $region43
      $region42: #{_mlp_forward_padded.1} parent=8 // pred_region
        %74 = vsyncadd %s30, 16
      $region43: #{_mlp_forward_padded.1} parent=8 // pred_fallthru
        _
      %s75 = scalar_lea.sflag [#allocation8], 2
      // Predicated region
      $region44: #{_mlp_forward_padded.1} parent=8 // pred_check
        _
      $region45: #{_mlp_forward_padded.1} parent=8 // pred_check_branch
        %77 = sbr.rel target = $region47
      $region46: #{_mlp_forward_padded.1} parent=8 // pred_region
        %78 = sst [smem:[#allocation13]] [#allocation17]
        %79 = sst [smem:[#allocation14]] [#allocation16]
      $region47: #{_mlp_forward_padded.1} parent=8 // pred_fallthru
        _
      %81 = shalt.err (0)
      %s83 = sshll.u32 [#allocation4], 4
      %s84 = int_to_ptr.vmem [resolvable:$true] %s83
      %86 = dma.hbm_to_vmem [thread:$0]  %s3, 2048, %s84, %s75
      %s87 = scalar_lea.sflag [#allocation8], 3
      %p89 = scmp.lt.u32.totalorder 1, 8
      %p90 = pneg %p89
      // Predicated region
      $region48: #{_mlp_forward_padded.1} parent=8 // pred_check
        _
      $region49: #{_mlp_forward_padded.1} parent=8 // pred_check_branch
        %92 = sbr.rel (%p89) target = $region51
      $region50: #{_mlp_forward_padded.1} parent=8 // pred_region
        %s107 = sand.u32 1, 7
        %p108 = scmp.eq.s32.totalorder %s107, 0
        %p109 = pneg %p108
        // Predicated region
        $region63: #{_mlp_forward_padded.1} parent=50 // pred_check
          _
        $region64: #{_mlp_forward_padded.1} parent=50 // pred_check_branch
          %111 = sbr.rel (%p108) target = $region66
        $region65: #{_mlp_forward_padded.1} parent=50 // pred_region
          %s112 = sand.u32 1, 7
          %s113 = ssub.s32 1, %s112
          %s114 = scalar_lea.vmem %s4, %s113
          %s115 = ssub.s32 1, %s112
          %s116 = scalar_lea.vmem [#allocation5], %s115
          %s117 = sshllo.u32 0, %s112
          loop: start=0, step=1, limit=1
          $region67: #{_mlp_forward_padded.1} parent=65 // loop_pre_header
            _
          $region68: #{_mlp_forward_padded.1} parent=65 // loop_header
            %s119 = sphi 0, %s123
            %p120 = scmp.ge.s32.totalorder %s119, 1
            %s124 = sphi %s114, %s114
            %s125 = sphi %s116, %s116
          $region69: #{_mlp_forward_padded.1} parent=65 // loop_header_branch
            %122 = sbr.rel (%p120) target = $region73
          $region70: #{_mlp_forward_padded.1} parent=65 // loop_body
            %v126 = vld [vmem:[%s124] sm:%s117]
            %127 = vst [vmem:[%s125] sm:%s117] %v126
          $region71: #{_mlp_forward_padded.1} parent=65 // loop_footer
            %s123 = sadd.s32 1, %s119
          $region72: #{_mlp_forward_padded.1} parent=65 // loop_footer_branch
            %118 = sbr.rel target = $region68
          $region73: #{_mlp_forward_padded.1} parent=65 // loop_exit
            _
        $region66: #{_mlp_forward_padded.1} parent=50 // pred_fallthru
          _
      $region51: #{_mlp_forward_padded.1} parent=8 // pred_fallthru
        _
      // Predicated region
      $region52: #{_mlp_forward_padded.1} parent=8 // pred_check
        %p93 = pneg %p89
      $region53: #{_mlp_forward_padded.1} parent=8 // pred_check_branch
        %95 = sbr.rel (%p93) target = $region55
      $region54: #{_mlp_forward_padded.1} parent=8 // pred_region
        %s96 = sshllo.u32 0, 1
        loop: start=0, step=1, limit=1
        $region56: #{_mlp_forward_padded.1} parent=54 // loop_pre_header
          _
        $region57: #{_mlp_forward_padded.1} parent=54 // loop_header
          %s98 = sphi 0, %s102
          %p99 = scmp.ge.s32.totalorder %s98, 1
          %s103 = sphi %s4, %s4
          %s104 = sphi [#allocation5], [#allocation5]
        $region58: #{_mlp_forward_padded.1} parent=54 // loop_header_branch
          %101 = sbr.rel (%p99) target = $region62
        $region59: #{_mlp_forward_padded.1} parent=54 // loop_body
          %v105 = vld [vmem:[%s103] sm:%s96]
          %106 = vst [vmem:[%s104] sm:%s96] %v105
        $region60: #{_mlp_forward_padded.1} parent=54 // loop_footer
          %s102 = sadd.s32 1, %s98
        $region61: #{_mlp_forward_padded.1} parent=54 // loop_footer_branch
          %97 = sbr.rel target = $region57
        $region62: #{_mlp_forward_padded.1} parent=54 // loop_exit
          _
      $region55: #{_mlp_forward_padded.1} parent=8 // pred_fallthru
        _
      // Predicated region
      $region74: #{_mlp_forward_padded.1} parent=8 // pred_check
        _
      $region75: #{_mlp_forward_padded.1} parent=8 // pred_check_branch
        %130 = sbr.rel (0) target = $region77
      $region76: #{_mlp_forward_padded.1} parent=8 // pred_region
        %131 = vsyncadd %s87, 16
      $region77: #{_mlp_forward_padded.1} parent=8 // pred_fallthru
        _
      %s132 = scalar_lea.sflag [#allocation8], 4
      // Predicated region
      $region78: #{_mlp_forward_padded.1} parent=8 // pred_check
        _
      $region79: #{_mlp_forward_padded.1} parent=8 // pred_check_branch
        %134 = sbr.rel target = $region81
      $region80: #{_mlp_forward_padded.1} parent=8 // pred_region
        %135 = sst [smem:[#allocation13]] [#allocation20]
        %136 = sst [smem:[#allocation14]] [#allocation19]
      $region81: #{_mlp_forward_padded.1} parent=8 // pred_fallthru
        _
      %138 = shalt.err (0)
      %s140 = sshll.u32 [#allocation6], 4
      %s141 = int_to_ptr.vmem [resolvable:$true] %s140
      %143 = dma.hbm_to_vmem [thread:$0]  %s5, 2048, %s141, %s132
      %s144 = scalar_lea.sflag [#allocation8], 5
      %p146 = scmp.lt.u32.totalorder 1, 8
      %p147 = pneg %p146
      // Predicated region
      $region82: #{_mlp_forward_padded.1} parent=8 // pred_check
        _
      $region83: #{_mlp_forward_padded.1} parent=8 // pred_check_branch
        %149 = sbr.rel (%p146) target = $region85
      $region84: #{_mlp_forward_padded.1} parent=8 // pred_region
        %s164 = sand.u32 1, 7
        %p165 = scmp.eq.s32.totalorder %s164, 0
        %p166 = pneg %p165
        // Predicated region
        $region97: #{_mlp_forward_padded.1} parent=84 // pred_check
          _
        $region98: #{_mlp_forward_padded.1} parent=84 // pred_check_branch
          %168 = sbr.rel (%p165) target = $region100
        $region99: #{_mlp_forward_padded.1} parent=84 // pred_region
          %s169 = sand.u32 1, 7
          %s170 = ssub.s32 1, %s169
          %s171 = scalar_lea.vmem %s6, %s170
          %s172 = ssub.s32 1, %s169
          %s173 = scalar_lea.vmem [#allocation7], %s172
          %s174 = sshllo.u32 0, %s169
          loop: start=0, step=1, limit=1
          $region101: #{_mlp_forward_padded.1} parent=99 // loop_pre_header
            _
          $region102: #{_mlp_forward_padded.1} parent=99 // loop_header
            %s176 = sphi 0, %s180
            %p177 = scmp.ge.s32.totalorder %s176, 1
            %s181 = sphi %s171, %s171
            %s182 = sphi %s173, %s173
          $region103: #{_mlp_forward_padded.1} parent=99 // loop_header_branch
            %179 = sbr.rel (%p177) target = $region107
          $region104: #{_mlp_forward_padded.1} parent=99 // loop_body
            %v183 = vld [vmem:[%s181] sm:%s174]
            %184 = vst [vmem:[%s182] sm:%s174] %v183
          $region105: #{_mlp_forward_padded.1} parent=99 // loop_footer
            %s180 = sadd.s32 1, %s176
          $region106: #{_mlp_forward_padded.1} parent=99 // loop_footer_branch
            %175 = sbr.rel target = $region102
          $region107: #{_mlp_forward_padded.1} parent=99 // loop_exit
            _
        $region100: #{_mlp_forward_padded.1} parent=84 // pred_fallthru
          _
      $region85: #{_mlp_forward_padded.1} parent=8 // pred_fallthru
        _
      // Predicated region
      $region86: #{_mlp_forward_padded.1} parent=8 // pred_check
        %p150 = pneg %p146
      $region87: #{_mlp_forward_padded.1} parent=8 // pred_check_branch
        %152 = sbr.rel (%p150) target = $region89
      $region88: #{_mlp_forward_padded.1} parent=8 // pred_region
        %s153 = sshllo.u32 0, 1
        loop: start=0, step=1, limit=1
        $region90: #{_mlp_forward_padded.1} parent=88 // loop_pre_header
          _
        $region91: #{_mlp_forward_padded.1} parent=88 // loop_header
          %s155 = sphi 0, %s159
          %p156 = scmp.ge.s32.totalorder %s155, 1
          %s160 = sphi %s6, %s6
          %s161 = sphi [#allocation7], [#allocation7]
        $region92: #{_mlp_forward_padded.1} parent=88 // loop_header_branch
          %158 = sbr.rel (%p156) target = $region96
        $region93: #{_mlp_forward_padded.1} parent=88 // loop_body
          %v162 = vld [vmem:[%s160] sm:%s153]
          %163 = vst [vmem:[%s161] sm:%s153] %v162
        $region94: #{_mlp_forward_padded.1} parent=88 // loop_footer
          %s159 = sadd.s32 1, %s155
        $region95: #{_mlp_forward_padded.1} parent=88 // loop_footer_branch
          %154 = sbr.rel target = $region91
        $region96: #{_mlp_forward_padded.1} parent=88 // loop_exit
          _
      $region89: #{_mlp_forward_padded.1} parent=8 // pred_fallthru
        _
      // Predicated region
      $region108: #{_mlp_forward_padded.1} parent=8 // pred_check
        _
      $region109: #{_mlp_forward_padded.1} parent=8 // pred_check_branch
        %187 = sbr.rel (0) target = $region111
      $region110: #{_mlp_forward_padded.1} parent=8 // pred_region
        %188 = vsyncadd %s144, 16
      $region111: #{_mlp_forward_padded.1} parent=8 // pred_fallthru
        _
      %s189 = smul.u32 128, 1
      %s190 = sshll.u32 %s189, 4
      %191 = dma.done [#allocation8], %s190
      %s192 = smul.u32 1, 1
      %s193 = sshll.u32 %s192, 4
      %194 = dma.done %s30, %s193
    $region9: #{_mlp_forward_padded.1} parent=1 // pred_fallthru
      _
    %v195 = vld [vmem:[%s0] sm:$0xff]
    %v196 = vld [vmem:[#allocation2] sm:$0xff]
    %v197 = vld [vmem:[#allocation2 + $0x8] sm:$0xff]
    %v198 = vld [vmem:[#allocation2 + $0x10] sm:$0xff]
    %v199 = vld [vmem:[#allocation2 + $0x18] sm:$0xff]
    %v200 = vld [vmem:[#allocation2 + $0x20] sm:$0xff]
    %v201 = vld [vmem:[#allocation2 + $0x28] sm:$0xff]
    %v202 = vld [vmem:[#allocation2 + $0x30] sm:$0xff]
    %v203 = vld [vmem:[#allocation2 + $0x38] sm:$0xff]
    %v204 = vld [vmem:[#allocation2 + $0x40] sm:$0xff]
    %v205 = vld [vmem:[#allocation2 + $0x48] sm:$0xff]
    %v206 = vld [vmem:[#allocation2 + $0x50] sm:$0xff]
    %v207 = vld [vmem:[#allocation2 + $0x58] sm:$0xff]
    %v208 = vld [vmem:[#allocation2 + $0x60] sm:$0xff]
    %v209 = vld [vmem:[#allocation2 + $0x68] sm:$0xff]
    %v210 = vld [vmem:[#allocation2 + $0x70] sm:$0xff]
    %v211 = vld [vmem:[#allocation2 + $0x78] sm:$0xff]
    %v212 = vld [vmem:[#allocation3] sm:$0x1]
    %v214 = vlaneseq
    %v215 = vshrl.u32 %v214, 7
    %v216 = vsub.s32 0, %v215
    %v217 = vrot.slane %v212, %v216
    %219 = vmatprep.subr.mxu0 0.0
    %220 = vmatpush1.msra.mxu0 %v196
    %221 = vmatprep.subr.mxu0 0.0
    %222 = vmatpush1.msra.mxu0 %v197
    %223 = vmatprep.subr.mxu0 0.0
    %224 = vmatpush1.msra.mxu0 %v198
    %225 = vmatprep.subr.mxu0 0.0
    %226 = vmatpush1.msra.mxu0 %v199
    %227 = vmatprep.subr.mxu0 0.0
    %228 = vmatpush1.msra.mxu0 %v200
    %229 = vmatprep.subr.mxu0 0.0
    %230 = vmatpush1.msra.mxu0 %v201
    %231 = vmatprep.subr.mxu0 0.0
    %232 = vmatpush1.msra.mxu0 %v202
    %233 = vmatprep.subr.mxu0 0.0
    %234 = vmatpush1.msra.mxu0 %v203
    %235 = vmatprep.subr.mxu0 0.0
    %236 = vmatpush1.msra.mxu0 %v204
    %237 = vmatprep.subr.mxu0 0.0
    %238 = vmatpush1.msra.mxu0 %v205
    %239 = vmatprep.subr.mxu0 0.0
    %240 = vmatpush1.msra.mxu0 %v206
    %241 = vmatprep.subr.mxu0 0.0
    %242 = vmatpush1.msra.mxu0 %v207
    %243 = vmatprep.subr.mxu0 0.0
    %244 = vmatpush1.msra.mxu0 %v208
    %245 = vmatprep.subr.mxu0 0.0
    %246 = vmatpush1.msra.mxu0 %v209
    %247 = vmatprep.subr.mxu0 0.0
    %248 = vmatpush1.msra.mxu0 %v210
    %249 = vmatprep.subr.mxu0 0.0
    %250 = vmatpush1.msra.mxu0 %v211
    %251 = vmatprep.subr.mxu0 0.0
    %252 = vmatpush1.msra.mxu0 0.0
    %253 = vmatprep.subr.mxu0 0.0
    %254 = vmatpush1.msra.mxu0 0.0
    %255 = vmatprep.subr.mxu0 0.0
    %256 = vmatpush1.msra.mxu0 0.0
    %257 = vmatprep.subr.mxu0 0.0
    %258 = vmatpush1.msra.mxu0 0.0
    %259 = vmatprep.subr.mxu0 0.0
    %260 = vmatpush1.msra.mxu0 0.0
    %261 = vmatprep.subr.mxu0 0.0
    %262 = vmatpush1.msra.mxu0 0.0
    %263 = vmatprep.subr.mxu0 0.0
    %264 = vmatpush1.msra.mxu0 0.0
    %265 = vmatprep.subr.mxu0 0.0
    %266 = vmatpush1.msra.mxu0 0.0
    %267 = vmatprep.subr.mxu0 0.0
    %268 = vmatpush1.msra.mxu0 0.0
    %269 = vmatprep.subr.mxu0 0.0
    %270 = vmatpush1.msra.mxu0 0.0
    %271 = vmatprep.subr.mxu0 0.0
    %272 = vmatpush1.msra.mxu0 0.0
    %273 = vmatprep.subr.mxu0 0.0
    %274 = vmatpush1.msra.mxu0 0.0
    %275 = vmatprep.subr.mxu0 0.0
    %276 = vmatpush1.msra.mxu0 0.0
    %277 = vmatprep.subr.mxu0 0.0
    %278 = vmatpush1.msra.mxu0 0.0
    %279 = vmatprep.subr.mxu0 0.0
    %280 = vmatpush1.msra.mxu0 0.0
    %281 = vmatprep.subr.mxu0 0.0
    %282 = vmatpush1.msra.mxu0 0.0
    %283 = vmatprep.mubr.f32.mxu0 0.0
    %284 = vmatmul.mubr.f32.gmra.mrb[0].mxu0 %v195
    %v285 = vpop.f32.mrb[0].mxu0
    %v286 = vadd.f32 %v217, %v285
    %v287 = vpop.f32.mrb[0].mxu0
    %288 = vdwg.mxu0
    %v289 = vmax.f32 %v286, 0.0
    // Predicated region
    $region112: #{_mlp_forward_padded.1} parent=1 // pred_check
      %p290 = pneg %p15
    $region113: #{_mlp_forward_padded.1} parent=1 // pred_check_branch
      %292 = sbr.rel (%p290) target = $region115
    $region114: #{_mlp_forward_padded.1} parent=1 // pred_region
      %s293 = scalar_lea.sflag [#allocation8], 2
      %s294 = smul.u32 128, 1
      %s295 = sshll.u32 %s294, 4
      %296 = dma.done %s293, %s295
      %s297 = scalar_lea.sflag [#allocation8], 3
      %s298 = smul.u32 1, 1
      %s299 = sshll.u32 %s298, 4
      %300 = dma.done %s297, %s299
    $region115: #{_mlp_forward_padded.1} parent=1 // pred_fallthru
      _
    %v301 = vld [vmem:[#allocation4] sm:$0xff]
    %v302 = vld [vmem:[#allocation4 + $0x8] sm:$0xff]
    %v303 = vld [vmem:[#allocation4 + $0x10] sm:$0xff]
    %v304 = vld [vmem:[#allocation4 + $0x18] sm:$0xff]
    %v305 = vld [vmem:[#allocation4 + $0x20] sm:$0xff]
    %v306 = vld [vmem:[#allocation4 + $0x28] sm:$0xff]
    %v307 = vld [vmem:[#allocation4 + $0x30] sm:$0xff]
    %v308 = vld [vmem:[#allocation4 + $0x38] sm:$0xff]
    %v309 = vld [vmem:[#allocation4 + $0x40] sm:$0xff]
    %v310 = vld [vmem:[#allocation4 + $0x48] sm:$0xff]
    %v311 = vld [vmem:[#allocation4 + $0x50] sm:$0xff]
    %v312 = vld [vmem:[#allocation4 + $0x58] sm:$0xff]
    %v313 = vld [vmem:[#allocation4 + $0x60] sm:$0xff]
    %v314 = vld [vmem:[#allocation4 + $0x68] sm:$0xff]
    %v315 = vld [vmem:[#allocation4 + $0x70] sm:$0xff]
    %v316 = vld [vmem:[#allocation4 + $0x78] sm:$0xff]
    %v317 = vld [vmem:[#allocation5] sm:$0x1]
    %v319 = vlaneseq
    %v320 = vshrl.u32 %v319, 7
    %v321 = vsub.s32 0, %v320
    %v322 = vrot.slane %v317, %v321
    %324 = vmatprep.subr.mxu0 0.0
    %325 = vmatpush1.msra.mxu0 %v301
    %326 = vmatprep.subr.mxu0 0.0
    %327 = vmatpush1.msra.mxu0 %v302
    %328 = vmatprep.subr.mxu0 0.0
    %329 = vmatpush1.msra.mxu0 %v303
    %330 = vmatprep.subr.mxu0 0.0
    %331 = vmatpush1.msra.mxu0 %v304
    %332 = vmatprep.subr.mxu0 0.0
    %333 = vmatpush1.msra.mxu0 %v305
    %334 = vmatprep.subr.mxu0 0.0
    %335 = vmatpush1.msra.mxu0 %v306
    %336 = vmatprep.subr.mxu0 0.0
    %337 = vmatpush1.msra.mxu0 %v307
    %338 = vmatprep.subr.mxu0 0.0
    %339 = vmatpush1.msra.mxu0 %v308
    %340 = vmatprep.subr.mxu0 0.0
    %341 = vmatpush1.msra.mxu0 %v309
    %342 = vmatprep.subr.mxu0 0.0
    %343 = vmatpush1.msra.mxu0 %v310
    %344 = vmatprep.subr.mxu0 0.0
    %345 = vmatpush1.msra.mxu0 %v311
    %346 = vmatprep.subr.mxu0 0.0
    %347 = vmatpush1.msra.mxu0 %v312
    %348 = vmatprep.subr.mxu0 0.0
    %349 = vmatpush1.msra.mxu0 %v313
    %350 = vmatprep.subr.mxu0 0.0
    %351 = vmatpush1.msra.mxu0 %v314
    %352 = vmatprep.subr.mxu0 0.0
    %353 = vmatpush1.msra.mxu0 %v315
    %354 = vmatprep.subr.mxu0 0.0
    %355 = vmatpush1.msra.mxu0 %v316
    %356 = vmatprep.subr.mxu0 0.0
    %357 = vmatpush1.msra.mxu0 0.0
    %358 = vmatprep.subr.mxu0 0.0
    %359 = vmatpush1.msra.mxu0 0.0
    %360 = vmatprep.subr.mxu0 0.0
    %361 = vmatpush1.msra.mxu0 0.0
    %362 = vmatprep.subr.mxu0 0.0
    %363 = vmatpush1.msra.mxu0 0.0
    %364 = vmatprep.subr.mxu0 0.0
    %365 = vmatpush1.msra.mxu0 0.0
    %366 = vmatprep.subr.mxu0 0.0
    %367 = vmatpush1.msra.mxu0 0.0
    %368 = vmatprep.subr.mxu0 0.0
    %369 = vmatpush1.msra.mxu0 0.0
    %370 = vmatprep.subr.mxu0 0.0
    %371 = vmatpush1.msra.mxu0 0.0
    %372 = vmatprep.subr.mxu0 0.0
    %373 = vmatpush1.msra.mxu0 0.0
    %374 = vmatprep.subr.mxu0 0.0
    %375 = vmatpush1.msra.mxu0 0.0
    %376 = vmatprep.subr.mxu0 0.0
    %377 = vmatpush1.msra.mxu0 0.0
    %378 = vmatprep.subr.mxu0 0.0
    %379 = vmatpush1.msra.mxu0 0.0
    %380 = vmatprep.subr.mxu0 0.0
    %381 = vmatpush1.msra.mxu0 0.0
    %382 = vmatprep.subr.mxu0 0.0
    %383 = vmatpush1.msra.mxu0 0.0
    %384 = vmatprep.subr.mxu0 0.0
    %385 = vmatpush1.msra.mxu0 0.0
    %386 = vmatprep.subr.mxu0 0.0
    %387 = vmatpush1.msra.mxu0 0.0
    %388 = vmatprep.mubr.f32.mxu0 0.0
    %389 = vmatmul.mubr.f32.gmra.mrb[0].mxu0 %v289
    %v390 = vpop.f32.mrb[0].mxu0
    %v391 = vadd.f32 %v322, %v390
    %v392 = vpop.f32.mrb[0].mxu0
    %393 = vdwg.mxu0
    %v394 = vmax.f32 %v391, 0.0
    // Predicated region
    $region116: #{_mlp_forward_padded.1} parent=1 // pred_check
      %p395 = pneg %p15
    $region117: #{_mlp_forward_padded.1} parent=1 // pred_check_branch
      %397 = sbr.rel (%p395) target = $region119
    $region118: #{_mlp_forward_padded.1} parent=1 // pred_region
      %s398 = scalar_lea.sflag [#allocation8], 4
      %s399 = smul.u32 128, 1
      %s400 = sshll.u32 %s399, 4
      %401 = dma.done %s398, %s400
      %s402 = scalar_lea.sflag [#allocation8], 5
      %s403 = smul.u32 1, 1
      %s404 = sshll.u32 %s403, 4
      %405 = dma.done %s402, %s404
    $region119: #{_mlp_forward_padded.1} parent=1 // pred_fallthru
      _
    %v406 = vld [vmem:[#allocation6] sm:$0xff]
    %v407 = vld [vmem:[#allocation6 + $0x8] sm:$0xff]
    %v408 = vld [vmem:[#allocation6 + $0x10] sm:$0xff]
    %v409 = vld [vmem:[#allocation6 + $0x18] sm:$0xff]
    %v410 = vld [vmem:[#allocation6 + $0x20] sm:$0xff]
    %v411 = vld [vmem:[#allocation6 + $0x28] sm:$0xff]
    %v412 = vld [vmem:[#allocation6 + $0x30] sm:$0xff]
    %v413 = vld [vmem:[#allocation6 + $0x38] sm:$0xff]
    %v414 = vld [vmem:[#allocation6 + $0x40] sm:$0xff]
    %v415 = vld [vmem:[#allocation6 + $0x48] sm:$0xff]
    %v416 = vld [vmem:[#allocation6 + $0x50] sm:$0xff]
    %v417 = vld [vmem:[#allocation6 + $0x58] sm:$0xff]
    %v418 = vld [vmem:[#allocation6 + $0x60] sm:$0xff]
    %v419 = vld [vmem:[#allocation6 + $0x68] sm:$0xff]
    %v420 = vld [vmem:[#allocation6 + $0x70] sm:$0xff]
    %v421 = vld [vmem:[#allocation6 + $0x78] sm:$0xff]
    %v422 = vld [vmem:[#allocation7] sm:$0x1]
    %v424 = vlaneseq
    %v425 = vshrl.u32 %v424, 7
    %v426 = vsub.s32 0, %v425
    %v427 = vrot.slane %v422, %v426
    %429 = vmatprep.subr.mxu0 0.0
    %430 = vmatpush1.msra.mxu0 %v406
    %431 = vmatprep.subr.mxu0 0.0
    %432 = vmatpush1.msra.mxu0 %v407
    %433 = vmatprep.subr.mxu0 0.0
    %434 = vmatpush1.msra.mxu0 %v408
    %435 = vmatprep.subr.mxu0 0.0
    %436 = vmatpush1.msra.mxu0 %v409
    %437 = vmatprep.subr.mxu0 0.0
    %438 = vmatpush1.msra.mxu0 %v410
    %439 = vmatprep.subr.mxu0 0.0
    %440 = vmatpush1.msra.mxu0 %v411
    %441 = vmatprep.subr.mxu0 0.0
    %442 = vmatpush1.msra.mxu0 %v412
    %443 = vmatprep.subr.mxu0 0.0
    %444 = vmatpush1.msra.mxu0 %v413
    %445 = vmatprep.subr.mxu0 0.0
    %446 = vmatpush1.msra.mxu0 %v414
    %447 = vmatprep.subr.mxu0 0.0
    %448 = vmatpush1.msra.mxu0 %v415
    %449 = vmatprep.subr.mxu0 0.0
    %450 = vmatpush1.msra.mxu0 %v416
    %451 = vmatprep.subr.mxu0 0.0
    %452 = vmatpush1.msra.mxu0 %v417
    %453 = vmatprep.subr.mxu0 0.0
    %454 = vmatpush1.msra.mxu0 %v418
    %455 = vmatprep.subr.mxu0 0.0
    %456 = vmatpush1.msra.mxu0 %v419
    %457 = vmatprep.subr.mxu0 0.0
    %458 = vmatpush1.msra.mxu0 %v420
    %459 = vmatprep.subr.mxu0 0.0
    %460 = vmatpush1.msra.mxu0 %v421
    %461 = vmatprep.subr.mxu0 0.0
    %462 = vmatpush1.msra.mxu0 0.0
    %463 = vmatprep.subr.mxu0 0.0
    %464 = vmatpush1.msra.mxu0 0.0
    %465 = vmatprep.subr.mxu0 0.0
    %466 = vmatpush1.msra.mxu0 0.0
    %467 = vmatprep.subr.mxu0 0.0
    %468 = vmatpush1.msra.mxu0 0.0
    %469 = vmatprep.subr.mxu0 0.0
    %470 = vmatpush1.msra.mxu0 0.0
    %471 = vmatprep.subr.mxu0 0.0
    %472 = vmatpush1.msra.mxu0 0.0
    %473 = vmatprep.subr.mxu0 0.0
    %474 = vmatpush1.msra.mxu0 0.0
    %475 = vmatprep.subr.mxu0 0.0
    %476 = vmatpush1.msra.mxu0 0.0
    %477 = vmatprep.subr.mxu0 0.0
    %478 = vmatpush1.msra.mxu0 0.0
    %479 = vmatprep.subr.mxu0 0.0
    %480 = vmatpush1.msra.mxu0 0.0
    %481 = vmatprep.subr.mxu0 0.0
    %482 = vmatpush1.msra.mxu0 0.0
    %483 = vmatprep.subr.mxu0 0.0
    %484 = vmatpush1.msra.mxu0 0.0
    %485 = vmatprep.subr.mxu0 0.0
    %486 = vmatpush1.msra.mxu0 0.0
    %487 = vmatprep.subr.mxu0 0.0
    %488 = vmatpush1.msra.mxu0 0.0
    %489 = vmatprep.subr.mxu0 0.0
    %490 = vmatpush1.msra.mxu0 0.0
    %491 = vmatprep.subr.mxu0 0.0
    %492 = vmatpush1.msra.mxu0 0.0
    %493 = vmatprep.mubr.f32.mxu0 0.0
    %494 = vmatmul.mubr.f32.gmra.mrb[0].mxu0 %v394
    %v495 = vpop.f32.mrb[0].mxu0
    %v496 = vadd.f32 %v427, %v495
    %v497 = vpop.f32.mrb[0].mxu0
    %498 = vdwg.mxu0
    %499 = vst [vmem:[#allocation9] sm:$0xff] %v496
    // Predicated region
    $region120: #{_mlp_forward_padded.1} parent=1 // pred_check
      _
    $region121: #{_mlp_forward_padded.1} parent=1 // pred_check_branch
      %501 = sbr.rel (0) target = $region123
    $region122: #{_mlp_forward_padded.1} parent=1 // pred_region
      %s503 = ssub.s32 128, 128
      %504 = vsyncadd [#allocation10], %s503
      %s506 = sshll.u32 [#allocation9], 4
      %s507 = int_to_ptr.vmem [resolvable:$true] %s506
      %509 = dma.vmem_to_hbm [thread:$0]  %s507, 128, %s7, [#allocation10]
    $region123: #{_mlp_forward_padded.1} parent=1 // pred_fallthru
      _
    // Predicated region
    $region124: #{_mlp_forward_padded.1} parent=1 // pred_check
      _
    $region125: #{_mlp_forward_padded.1} parent=1 // pred_check_branch
      %511 = sbr.rel (0) target = $region127
    $region126: #{_mlp_forward_padded.1} parent=1 // pred_region
      %512 = dma.done [#allocation10], 128
    $region127: #{_mlp_forward_padded.1} parent=1 // pred_fallthru
      _
    %513 = vsyncpa [#allocation10], 1
  %514 = vsyncmov [#allocation8]
  %s515 = vpop.sfrf %514
  %p516 = scmp.eq.s32.totalorder %s515, 0
  %p517 = pneg %p516
  %519 = shalt.err (%p517)
  %s520 = scalar_lea.sflag [#allocation8], 1
  %521 = vsyncmov %s520
  %s522 = vpop.sfrf %521
  %p523 = scmp.eq.s32.totalorder %s522, 0
  %p524 = pneg %p523
  %526 = shalt.err (%p524)
  %s527 = scalar_lea.sflag [#allocation8], 2
  %528 = vsyncmov %s527
  %s529 = vpop.sfrf %528
  %p530 = scmp.eq.s32.totalorder %s529, 0
  %p531 = pneg %p530
  %533 = shalt.err (%p531)
  %s534 = scalar_lea.sflag [#allocation8], 3
  %535 = vsyncmov %s534
  %s536 = vpop.sfrf %535
  %p537 = scmp.eq.s32.totalorder %s536, 0
  %p538 = pneg %p537
  %540 = shalt.err (%p538)
  %s541 = scalar_lea.sflag [#allocation8], 4
  %542 = vsyncmov %s541
  %s543 = vpop.sfrf %542
  %p544 = scmp.eq.s32.totalorder %s543, 0
  %p545 = pneg %p544
  %547 = shalt.err (%p545)
  %s548 = scalar_lea.sflag [#allocation8], 5
  %549 = vsyncmov %s548
  %s550 = vpop.sfrf %549
  %p551 = scmp.eq.s32.totalorder %s550, 0
  %p552 = pneg %p551
  %554 = shalt.err (%p552)

</llo_original>
